<compile_context>
chip_gen: v7x
topology: tpu7x:2x2x1
jax: 0.10.0
libtpu: 0.0.40
codegen_flags: <defaults>
</compile_context>

<pallas_src>
import math
from typing import NamedTuple

import jax
import jax.numpy as jnp
from jax.experimental import pallas as pl
from jax.experimental.pallas import tpu as pltpu


def _round_up(x, m):
    return ((x + m - 1) // m) * m


def _cdiv(a, b):
    return (a + b - 1) // b


# ----------------------------------------------------------------------------
# GELU epilogues (computed in f32, EUP-friendly)
# ----------------------------------------------------------------------------
_SQRT_2_OVER_PI = 0.7978845608028654
_INV_SQRT2 = 0.7071067811865476


def _gelu_tanh(x):
    # tanh goes to the EUP slot; only ~6-8 VALU ops/element. |err vs exact| ~1e-3.
    inner = _SQRT_2_OVER_PI * (x + 0.044715 * (x * x * x))
    return 0.5 * x * (1.0 + jnp.tanh(inner))


def _erf(z):
    """erf via Abramowitz & Stegun 7.1.26 (|err| < 1.5e-7); exp + recip on EUP."""
    a1, a2, a3, a4, a5 = (0.254829592, -0.284496736, 1.421413741,
                          -1.453152027, 1.061405429)
    p = 0.3275911
    s = jnp.sign(z)
    a = jnp.abs(z)
    t = pl.reciprocal(1.0 + p * a, approx=True)
    poly = ((((a5 * t + a4) * t + a3) * t + a2) * t + a1) * t
    return s * (1.0 - poly * jnp.exp(-a * a))


def _gelu_erf(x):
    # exact formulation (matches torch.nn.GELU() default)
    return 0.5 * x * (1.0 + _erf(x * _INV_SQRT2))


# ----------------------------------------------------------------------------
# fused FFN kernel: grid = (row tiles [parallel], hidden chunks [arbitrary])
# ----------------------------------------------------------------------------
def _make_ffn_kernel(gelu_fn):
    def kernel(x_ref, w1_ref, b1_ref, w2_ref, b2_ref, o_ref, acc_ref):
        j = pl.program_id(1)

        @pl.when(j == 0)
        def _():
            acc_ref[...] = jnp.zeros_like(acc_ref)

        # in-kernel bf16 cast of the activation tile (cheap VPU work, hidden
        # under the DMA); keeps the MXU on its bf16 fast path.
        x = x_ref[...].astype(w1_ref.dtype)
        h = jnp.dot(x, w1_ref[...], preferred_element_type=jnp.float32)
        h = gelu_fn(h + b1_ref[...])
        # TODO(synk): dropout is identity (p=0.0 / inference); training-mode
        # dropout would use pltpu.prng_seed + pltpu.prng_random_bits here.
        acc_ref[...] += jnp.dot(h.astype(w2_ref.dtype), w2_ref[...],
                                preferred_element_type=jnp.float32)

        @pl.when(j == pl.num_programs(1) - 1)
        def _():
            o_ref[...] = (acc_ref[...] + b2_ref[...]).astype(o_ref.dtype)

    return kernel


# ----------------------------------------------------------------------------
# params: pad (lane-dense) + cast ONCE at init time (hoisted out of the call)
# ----------------------------------------------------------------------------
class FFNParams(NamedTuple):
    w1: jax.Array   # [Dp, Hp]  compute_dtype
    b1: jax.Array   # [1, Hp]   f32
    w2: jax.Array   # [Hp, Dp]  compute_dtype
    b2: jax.Array   # [1, Dp]   f32
    dim: int
    hidden: int


def prepare_feedforward_params(w1, b1, w2, b2, *, compute_dtype=jnp.bfloat16):
    D, H = w1.shape
    assert w2.shape == (H, D) and b1.shape == (H,) and b2.shape == (D,)
    Dp, Hp = _round_up(D, 128), _round_up(H, 128)
    w1p = jnp.pad(w1, ((0, Dp - D), (0, Hp - H))) if (Dp != D or Hp != H) else w1
    w2p = jnp.pad(w2, ((0, Hp - H), (0, Dp - D))) if (Dp != D or Hp != H) else w2
    b1p = (jnp.pad(b1, (0, Hp - H)) if Hp != H else b1).reshape(1, Hp)
    b2p = (jnp.pad(b2, (0, Dp - D)) if Dp != D else b2).reshape(1, Dp)
    return FFNParams(w1p.astype(compute_dtype), b1p.astype(jnp.float32),
                     w2p.astype(compute_dtype), b2p.astype(jnp.float32),
                     dim=D, hidden=H)


# ----------------------------------------------------------------------------
# VMEM-aware tile selection
# ----------------------------------------------------------------------------
def _vmem_capacity_bytes():
    try:
        cap = int(getattr(pltpu.get_tpu_info(), "vmem_capacity_bytes", 0))
        if cap > 0:
            return cap
    except Exception:
        pass
    return 64 * 1024 * 1024   # conservative fallback (= v7x per-TC)


def _estimate_vmem(tm, th, Dp, xbytes, cbytes, obytes):
    blocks = 2 * (tm * Dp * xbytes        # x tile        (double-buffered)
                  + tm * Dp * obytes      # out tile
                  + Dp * th * cbytes      # W1 tile
                  + th * Dp * cbytes      # W2 tile
                  + th * 4 + Dp * 4)      # b1, b2 (f32)
    scratch = tm * Dp * 4                 # f32 accumulator
    temps = tm * th * (4 + cbytes) + tm * Dp * (4 + cbytes)   # h / casts / partial
    return blocks + scratch + temps


def _pick_tiles(M, Dp, Hp, xbytes, cbytes, obytes, block_rows, budget):
    tm = min(block_rows, _round_up(M, 8))
    # keep >= 2 steps on the parallel row axis for larger M so both v7x TCs work
    if M > 256 and _cdiv(M, tm) < 2:
        tm = _round_up(_cdiv(M, 2), 8)
    while True:
        n128 = Hp // 128
        th = None
        for chunks in range(1, n128 + 1):       # smallest chunk count that fits
            if n128 % chunks:
                continue
            cand = Hp // chunks
            if _estimate_vmem(tm, cand, Dp, xbytes, cbytes, obytes) <= budget:
                th = cand
                break
        if th is not None:
            return tm, th
        if tm <= 8:
            return tm, 128                      # best effort
        tm = max(8, _round_up(tm // 2, 8))


# ----------------------------------------------------------------------------
# wrapper
# ----------------------------------------------------------------------------
def feedforward(x, params: FFNParams, *, block_rows=512, gelu_approximate=True,
                interpret=False):
    """x: [..., dim] -> [..., dim], params from prepare_feedforward_params()."""
    orig_shape = x.shape
    D = params.dim
    assert orig_shape[-1] == D
    Dp, Hp = params.w1.shape
    M = math.prod(orig_shape[:-1])
    out_dtype = x.dtype

    xbytes = jnp.dtype(x.dtype).itemsize
    cbytes = jnp.dtype(params.w1.dtype).itemsize
    obytes = jnp.dtype(out_dtype).itemsize

    cap = _vmem_capacity_bytes()
    budget = int(cap * 0.8)
    tm, th = _pick_tiles(M, Dp, Hp, xbytes, cbytes, obytes, block_rows, budget)
    need = _estimate_vmem(tm, th, Dp, xbytes, cbytes, obytes)
    vmem_limit = int(min(cap, max(need + (8 << 20), 32 << 20)))

    # activation padding (rows at most once; feature pad is a no-op if aligned)
    x2 = x.reshape(M, D)
    if Dp != D:
        x2 = jnp.pad(x2, ((0, 0), (0, Dp - D)))
    Mp = _round_up(M, tm)
    if Mp != M:
        x2 = jnp.pad(x2, ((0, Mp - M), (0, 0)))

    kernel = _make_ffn_kernel(_gelu_tanh if gelu_approximate else _gelu_erf)

    out = pl.pallas_call(
        kernel,
        out_shape=jax.ShapeDtypeStruct((Mp, Dp), out_dtype),
        grid=(Mp // tm, Hp // th),
        in_specs=[
            pl.BlockSpec((tm, Dp), lambda i, j: (i, 0)),   # x   (resident over j)
            pl.BlockSpec((Dp, th), lambda i, j: (0, j)),   # W1 chunk
            pl.BlockSpec((1, th), lambda i, j: (0, j)),    # b1 chunk
            pl.BlockSpec((th, Dp), lambda i, j: (j, 0)),   # W2 chunk
            pl.BlockSpec((1, Dp), lambda i, j: (0, 0)),    # b2
        ],
        out_specs=pl.BlockSpec((tm, Dp), lambda i, j: (i, 0)),
        scratch_shapes=[pltpu.VMEM((tm, Dp), jnp.float32)],
        compiler_params=pltpu.CompilerParams(
            dimension_semantics=("parallel", "arbitrary"),
            vmem_limit_bytes=vmem_limit,
        ),
        interpret=interpret,
    )(x2, params.w1, params.b1, params.w2, params.b2)

    out = out[:M, :D]
    return out.reshape(orig_shape)


# ----------------------------------------------------------------------------
# deterministic params (mirrors torch.nn.Linear default init)
# ----------------------------------------------------------------------------
def init_feedforward_params(key, dim, hidden_dim, dtype=jnp.float32):
    k1, k2, k3, k4 = jax.random.split(key, 4)
    bound1 = 1.0 / math.sqrt(dim)
    bound2 = 1.0 / math.sqrt(hidden_dim)
    w1 = jax.random.uniform(k1, (dim, hidden_dim), dtype, -bound1, bound1)
    b1 = jax.random.uniform(k2, (hidden_dim,), dtype, -bound1, bound1)
    w2 = jax.random.uniform(k3, (hidden_dim, dim), dtype, -bound2, bound2)
    b2 = jax.random.uniform(k4, (dim,), dtype, -bound2, bound2)
    return w1, b1, w2, b2


# ----------------------------------------------------------------------------
# main
# ----------------------------------------------------------------------------
if __name__ == "__main__":
    B, S, dim, hidden_dim = 2, 8, 128, 256   # lane-dense shapes (multiples of 128)

    key = jax.random.PRNGKey(0)
    kx, kp = jax.random.split(key)
    x = jax.random.normal(kx, (B, S, dim), jnp.float32)
    w1, b1, w2, b2 = init_feedforward_params(kp, dim, hidden_dim)

    # pad + bf16-cast the weights ONCE (hoisted out of the per-call path)
    params = prepare_feedforward_params(w1, b1, w2, b2)

    y = feedforward(x, params)
    y = jax.block_until_ready(y)

    # pure-JAX reference (tolerance covers bf16 MXU inputs + tanh-GELU approx)
    ref = jnp.dot(jax.nn.gelu(jnp.dot(x, w1) + b1, approximate=False), w2) + b2

    assert y.shape == (B, S, dim), y.shape
    assert bool(jnp.all(jnp.isfinite(y)))
    err = float(jnp.max(jnp.abs(y - ref)))
    assert err < 5e-2, f"max abs err {err}"
    print("KERNEL_OK")
</pallas_src>

<mosaic_0001>
module attributes {stable_mosaic.version = 11 : i64} {
  func.func @kernel(%arg0: i32, %arg1: i32, %arg2: memref<16x128xf32, #tpu.memory_space<vmem>>, %arg3: memref<128x256xbf16, #tpu.memory_space<vmem>>, %arg4: memref<1x256xf32, #tpu.memory_space<vmem>>, %arg5: memref<256x128xbf16, #tpu.memory_space<vmem>>, %arg6: memref<1x128xf32, #tpu.memory_space<vmem>>, %arg7: memref<16x128xf32, #tpu.memory_space<vmem>>, %arg8: memref<16x128xf32, #tpu.memory_space<vmem>>) attributes {dimension_semantics = [#tpu.dimension_semantics<parallel>, #tpu.dimension_semantics<arbitrary>], iteration_bounds = array<i64: 1, 1>, scalar_prefetch = 0 : i64, scratch_operands = 1 : i64, tpu.core_type = #tpu.core_type<tc>, window_params = [{transform_indices = @transform_0, window_bounds = array<i64: 16, 128>}, {transform_indices = @transform_1, window_bounds = array<i64: 128, 256>}, {transform_indices = @transform_2, window_bounds = array<i64: 1, 256>}, {transform_indices = @transform_3, window_bounds = array<i64: 256, 128>}, {pipeline_mode = #tpu.pipeline_mode<synchronous>, transform_indices = @transform_4, window_bounds = array<i64: 1, 128>}, {transform_indices = @transform_5, window_bounds = array<i64: 16, 128>}]} {
    %c0_i32 = arith.constant 0 : i32
    %0 = arith.cmpi eq, %arg1, %c0_i32 : i32
    %1 = arith.extui %0 : i1 to i32
    %c0_i32_0 = arith.constant 0 : i32
    %2 = arith.cmpi ne, %1, %c0_i32_0 : i32
    scf.if %2 {
      %cst_19 = arith.constant 0.000000e+00 : f32
      %32 = vector.broadcast %cst_19 : f32 to vector<16x128xf32>
      %c0_20 = arith.constant 0 : index
      %c0_21 = arith.constant 0 : index
      %33 = vector.load %arg8[%c0_20, %c0_21] : memref<16x128xf32, #tpu.memory_space<vmem>>, vector<16x128xf32>
      tpu.vector_store %arg8[%c0_20, %c0_21], %32 {strides = array<i32>} : memref<16x128xf32, #tpu.memory_space<vmem>>, vector<16x128xf32>,
    } else {
    }
    %c0 = arith.constant 0 : index
    %c0_1 = arith.constant 0 : index
    %3 = vector.load %arg2[%c0, %c0_1] : memref<16x128xf32, #tpu.memory_space<vmem>>, vector<16x128xf32>
    %4 = arith.truncf %3 : vector<16x128xf32> to vector<16x128xbf16>
    %c0_2 = arith.constant 0 : index
    %c0_3 = arith.constant 0 : index
    %5 = vector.load %arg3[%c0_2, %c0_3] : memref<128x256xbf16, #tpu.memory_space<vmem>>, vector<128x256xbf16>
    %cst = arith.constant dense<0.000000e+00> : vector<16x256xf32>
    %6 = tpu.matmul %4, %5, %cst {dimension_numbers = #tpu.dot_dimension_numbers<[1], [0], [0], [1], [0, 0, 1, 1], [], []>} : vector<16x128xbf16>, vector<128x256xbf16>, vector<16x256xf32> -> vector<16x256xf32>
    %c0_4 = arith.constant 0 : index
    %c0_5 = arith.constant 0 : index
    %7 = vector.load %arg4[%c0_4, %c0_5] : memref<1x256xf32, #tpu.memory_space<vmem>>, vector<1x256xf32>
    %8 = vector.broadcast %7 : vector<1x256xf32> to vector<16x256xf32>
    %9 = arith.addf %6, %8 : vector<16x256xf32>
    %10 = arith.mulf %9, %9 : vector<16x256xf32>
    %11 = arith.mulf %10, %9 : vector<16x256xf32>
    %cst_6 = arith.constant 4.471500e-02 : f32
    %12 = vector.broadcast %cst_6 : f32 to vector<16x256xf32>
    %13 = arith.mulf %12, %11 : vector<16x256xf32>
    %14 = arith.addf %9, %13 : vector<16x256xf32>
    %cst_7 = arith.constant 0.797884583 : f32
    %15 = vector.broadcast %cst_7 : f32 to vector<16x256xf32>
    %16 = arith.mulf %15, %14 : vector<16x256xf32>
    %cst_8 = arith.constant 5.000000e-01 : f32
    %17 = vector.broadcast %cst_8 : f32 to vector<16x256xf32>
    %18 = arith.mulf %17, %9 : vector<16x256xf32>
    %19 = math.tanh %16 : vector<16x256xf32>
    %cst_9 = arith.constant 1.000000e+00 : f32
    %20 = vector.broadcast %cst_9 : f32 to vector<16x256xf32>
    %21 = arith.addf %20, %19 : vector<16x256xf32>
    %22 = arith.mulf %18, %21 : vector<16x256xf32>
    %c0_10 = arith.constant 0 : index
    %c0_11 = arith.constant 0 : index
    %23 = vector.load %arg8[%c0_10, %c0_11] : memref<16x128xf32, #tpu.memory_space<vmem>>, vector<16x128xf32>
    %24 = arith.truncf %22 : vector<16x256xf32> to vector<16x256xbf16>
    %c0_12 = arith.constant 0 : index
    %c0_13 = arith.constant 0 : index
    %25 = vector.load %arg5[%c0_12, %c0_13] : memref<256x128xbf16, #tpu.memory_space<vmem>>, vector<256x128xbf16>
    %cst_14 = arith.constant dense<0.000000e+00> : vector<16x128xf32>
    %26 = tpu.matmul %24, %25, %cst_14 {dimension_numbers = #tpu.dot_dimension_numbers<[1], [0], [0], [1], [0, 0, 1, 1], [], []>} : vector<16x256xbf16>, vector<256x128xbf16>, vector<16x128xf32> -> vector<16x128xf32>
    %27 = arith.addf %23, %26 : vector<16x128xf32>
    %c0_15 = arith.constant 0 : index
    %c0_16 = arith.constant 0 : index
    %28 = vector.load %arg8[%c0_15, %c0_16] : memref<16x128xf32, #tpu.memory_space<vmem>>, vector<16x128xf32>
    tpu.vector_store %arg8[%c0_15, %c0_16], %27 {strides = array<i32>} : memref<16x128xf32, #tpu.memory_space<vmem>>, vector<16x128xf32>,
    %c0_i32_17 = arith.constant 0 : i32
    %29 = arith.cmpi eq, %arg1, %c0_i32_17 : i32
    %30 = arith.extui %29 : i1 to i32
    %c0_i32_18 = arith.constant 0 : i32
    %31 = arith.cmpi ne, %30, %c0_i32_18 : i32
    scf.if %31 {
      %c0_19 = arith.constant 0 : index
      %c0_20 = arith.constant 0 : index
      %32 = vector.load %arg8[%c0_19, %c0_20] : memref<16x128xf32, #tpu.memory_space<vmem>>, vector<16x128xf32>
      %c0_21 = arith.constant 0 : index
      %c0_22 = arith.constant 0 : index
      %33 = vector.load %arg6[%c0_21, %c0_22] : memref<1x128xf32, #tpu.memory_space<vmem>>, vector<1x128xf32>
      %34 = vector.broadcast %33 : vector<1x128xf32> to vector<16x128xf32>
      %35 = arith.addf %32, %34 : vector<16x128xf32>
      %c0_23 = arith.constant 0 : index
      %c0_24 = arith.constant 0 : index
      %36 = vector.load %arg7[%c0_23, %c0_24] : memref<16x128xf32, #tpu.memory_space<vmem>>, vector<16x128xf32>
      tpu.vector_store %arg7[%c0_23, %c0_24], %35 {strides = array<i32>} : memref<16x128xf32, #tpu.memory_space<vmem>>, vector<16x128xf32>,
    } else {
    }
    return
  }
  func.func @transform_0(%arg0: i32, %arg1: i32) -> (i32, i32) {
    %c0_i32 = arith.constant 0 : i32
    %c0_i32_0 = arith.constant 0 : i32
    return %arg0, %c0_i32 : i32, i32
  }
  func.func @transform_1(%arg0: i32, %arg1: i32) -> (i32, i32) {
    %c0_i32 = arith.constant 0 : i32
    %c0_i32_0 = arith.constant 0 : i32
    return %c0_i32, %arg1 : i32, i32
  }
  func.func @transform_2(%arg0: i32, %arg1: i32) -> (i32, i32) {
    %c0_i32 = arith.constant 0 : i32
    %c0_i32_0 = arith.constant 0 : i32
    return %c0_i32, %arg1 : i32, i32
  }
  func.func @transform_3(%arg0: i32, %arg1: i32) -> (i32, i32) {
    %c0_i32 = arith.constant 0 : i32
    %c0_i32_0 = arith.constant 0 : i32
    return %arg1, %c0_i32 : i32, i32
  }
  func.func @transform_4(%arg0: i32, %arg1: i32) -> (i32, i32) {
    %c0_i32 = arith.constant 0 : i32
    %c0_i32_0 = arith.constant 0 : i32
    %c0_i32_1 = arith.constant 0 : i32
    return %c0_i32, %c0_i32_0 : i32, i32
  }
  func.func @transform_5(%arg0: i32, %arg1: i32) -> (i32, i32) {
    %c0_i32 = arith.constant 0 : i32
    %c0_i32_0 = arith.constant 0 : i32
    return %arg0, %c0_i32 : i32, i32
  }
}

</mosaic_0001>

<llo_original>
// kernel: tpu_custom_call.1
$region0: #{tpu_custom_call.1}
  #allocation0 [shape = 'u32[]', space=smem, size = 0x4, offset = 0x4, fixed_abs, tag = 'smem constant byte address 0x4 - core index']
  #allocation1 [shape = 'u32[144,128]{1,0:T(1,128)}', space=vmem, size = 0x12000, scoped, tag = 'internal scratch']
  #allocation2 [shape = 'f32[16,128]{1,0:T(8,128)}', space=vmem, size = 0x2000, scoped, tag = 'scratch operand']
  %s0 = inlined_call_operand.hbm [shape: f32[16,128], index: 0, kind: input, shape index: {}]
  %s1 = inlined_call_operand.hbm [shape: bf16[128,256], index: 1, kind: input, shape index: {}]
  %s2 = inlined_call_operand.vmem [shape: f32[1,256], index: 2, kind: input, shape index: {}]
  %s3 = inlined_call_operand.hbm [shape: bf16[256,128], index: 3, kind: input, shape index: {}]
  %s4 = inlined_call_operand.vmem [shape: f32[1,128], index: 4, kind: input, shape index: {}]
  %s5 = inlined_call_operand.hbm [shape: f32[16,128], index: 5, kind: output, shape index: {}]
  %s6 = sld [smem:[#allocation0]]
  $region50: #{tpu_custom_call.1} parent=0
    _
  %s8 = ssub.s32 1, %s6
  %s9 = scalar_select 0, %s8, %s6
  $region1: #{tpu_custom_call.1} parent=0
    #allocation3 [shape = 'u8[8192]{0}', space=vmem, size = 0x2000, scoped, tag = 'input window, operand 0, single buffered']
    #allocation4 [shape = 's32[1]{0}', space=sflag, size = 0x4, scoped, tag = 'scoped memory for tpu_custom_call.1']
    #allocation5 [shape = 's32[1]{0}', space=sflag, size = 0x4, scoped, tag = 'scoped memory for tpu_custom_call.1']
    #allocation6 [shape = 'u8[65536]{0}', space=vmem, size = 0x10000, scoped, tag = 'input window, operand 1, single buffered']
    #allocation7 [shape = 's32[1]{0}', space=sflag, size = 0x4, scoped, tag = 'scoped memory for tpu_custom_call.1']
    #allocation8 [shape = 'u8[65536]{0}', space=vmem, size = 0x10000, scoped, tag = 'input window, operand 3, single buffered']
    #allocation9 [shape = 'u8[8192]{0}', space=vmem, size = 0x2000, scoped, tag = 'output window, operand 0, single buffered']
    %10 = vsyncpa [#allocation4], 0
    %11 = vsyncpa [#allocation7], 0
    %12 = vsyncpa [#allocation5], 0
    // Predicated region
    $region2: #{tpu_custom_call.1} parent=1 // pred_check
      _
    $region3: #{tpu_custom_call.1} parent=1 // pred_check_branch
      %14 = sbr.rel (0) target = $region5
    $region4: #{tpu_custom_call.1} parent=1 // pred_region
      %s16 = ssub.s32 256, 256
      %17 = vsyncadd [#allocation4], %s16
      %s18 = sshll.u32 [#allocation3], 4
      %s19 = int_to_ptr.vmem [resolvable:$true] %s18
      %24 = dma.hbm_to_vmem [thread:$0]  %s0, 256, %s19, [#allocation4], 128, 128, 8
    $region5: #{tpu_custom_call.1} parent=1 // pred_fallthru
      _
    // Predicated region
    $region6: #{tpu_custom_call.1} parent=1 // pred_check
      _
    $region7: #{tpu_custom_call.1} parent=1 // pred_check_branch
      %26 = sbr.rel (0) target = $region9
    $region8: #{tpu_custom_call.1} parent=1 // pred_region
      %s28 = ssub.s32 2048, 2048
      %29 = vsyncadd [#allocation7], %s28
      %s30 = sshll.u32 [#allocation6], 4
      %s31 = int_to_ptr.vmem [resolvable:$true] %s30
      %36 = dma.hbm_to_vmem [thread:$0]  %s1, 2048, %s31, [#allocation7], 128, 128, 8
    $region9: #{tpu_custom_call.1} parent=1 // pred_fallthru
      _
    // Predicated region
    $region10: #{tpu_custom_call.1} parent=1 // pred_check
      _
    $region11: #{tpu_custom_call.1} parent=1 // pred_check_branch
      %38 = sbr.rel (0) target = $region13
    $region12: #{tpu_custom_call.1} parent=1 // pred_region
      _
    $region13: #{tpu_custom_call.1} parent=1 // pred_fallthru
      _
    // Predicated region
    $region14: #{tpu_custom_call.1} parent=1 // pred_check
      _
    $region15: #{tpu_custom_call.1} parent=1 // pred_check_branch
      %40 = sbr.rel (0) target = $region17
    $region16: #{tpu_custom_call.1} parent=1 // pred_region
      %s42 = ssub.s32 2048, 2048
      %43 = vsyncadd [#allocation7], %s42
      %s44 = sshll.u32 [#allocation8], 4
      %s45 = int_to_ptr.vmem [resolvable:$true] %s44
      %50 = dma.hbm_to_vmem [thread:$0]  %s3, 2048, %s45, [#allocation7], 64, 64, 4
    $region17: #{tpu_custom_call.1} parent=1 // pred_fallthru
      _
    // Predicated region
    $region18: #{tpu_custom_call.1} parent=1 // pred_check
      _
    $region19: #{tpu_custom_call.1} parent=1 // pred_check_branch
      %52 = sbr.rel (0) target = $region21
    $region20: #{tpu_custom_call.1} parent=1 // pred_region
      _
    $region21: #{tpu_custom_call.1} parent=1 // pred_fallthru
      _
    // Predicated region
    $region22: #{tpu_custom_call.1} parent=1 // pred_check
      _
    $region23: #{tpu_custom_call.1} parent=1 // pred_check_branch
      %54 = sbr.rel (0) target = $region25
    $region24: #{tpu_custom_call.1} parent=1 // pred_region
      %55 = dma.done [#allocation4], 256
    $region25: #{tpu_custom_call.1} parent=1 // pred_fallthru
      _
    // Predicated region
    $region26: #{tpu_custom_call.1} parent=1 // pred_check
      _
    $region27: #{tpu_custom_call.1} parent=1 // pred_check_branch
      %57 = sbr.rel (0) target = $region29
    $region28: #{tpu_custom_call.1} parent=1 // pred_region
      %58 = dma.done [#allocation7], 2048
    $region29: #{tpu_custom_call.1} parent=1 // pred_fallthru
      _
    // Predicated region
    $region30: #{tpu_custom_call.1} parent=1 // pred_check
      _
    $region31: #{tpu_custom_call.1} parent=1 // pred_check_branch
      %60 = sbr.rel (0) target = $region33
    $region32: #{tpu_custom_call.1} parent=1 // pred_region
      %61 = dma.done [#allocation7], 2048
    $region33: #{tpu_custom_call.1} parent=1 // pred_fallthru
      _
    %p63 = scmp.eq.s32.totalorder 0, 0
    // Predicated region
    $region34: #{tpu_custom_call.1} parent=1 // pred_check
      %p64 = pneg %p63
    $region35: #{tpu_custom_call.1} parent=1 // pred_check_branch
      %66 = sbr.rel (%p64) target = $region37
    $region36: #{tpu_custom_call.1} parent=1 // pred_region
      %67 = vst [vmem:[#allocation2] sm:$0xff] 0.0
      %68 = vst [vmem:[#allocation2 + $0x8] sm:$0xff] 0.0
    $region37: #{tpu_custom_call.1} parent=1 // pred_fallthru
      _
    %v69 = vld [vmem:[#allocation3] sm:$0xff]
    %v70 = vld [vmem:[#allocation3 + $0x8] sm:$0xff]
    %v71 = vpack.c.bf16 %v70, %v69
    %v72 = vld [vmem:[#allocation6] sm:$0xff]
    %v73 = vld [vmem:[#allocation6 + $0x8] sm:$0xff]
    %v74 = vld [vmem:[#allocation6 + $0x10] sm:$0xff]
    %v75 = vld [vmem:[#allocation6 + $0x18] sm:$0xff]
    %v76 = vld [vmem:[#allocation6 + $0x20] sm:$0xff]
    %v77 = vld [vmem:[#allocation6 + $0x28] sm:$0xff]
    %v78 = vld [vmem:[#allocation6 + $0x30] sm:$0xff]
    %v79 = vld [vmem:[#allocation6 + $0x38] sm:$0xff]
    %v80 = vld [vmem:[#allocation6 + $0x40] sm:$0xff]
    %v81 = vld [vmem:[#allocation6 + $0x48] sm:$0xff]
    %v82 = vld [vmem:[#allocation6 + $0x50] sm:$0xff]
    %v83 = vld [vmem:[#allocation6 + $0x58] sm:$0xff]
    %v84 = vld [vmem:[#allocation6 + $0x60] sm:$0xff]
    %v85 = vld [vmem:[#allocation6 + $0x68] sm:$0xff]
    %v86 = vld [vmem:[#allocation6 + $0x70] sm:$0xff]
    %v87 = vld [vmem:[#allocation6 + $0x78] sm:$0xff]
    %v88 = vld [vmem:[%s2] sm:$0x3]
    %v90 = vlaneseq
    %v91 = vshrl.u32 %v90, 7
    %v92 = vsub.s32 0, %v91
    %v93 = vrot.slane %v88, %v92
    %v94 = vlaneseq
    %v95 = vshrl.u32 %v94, 7
    %v96 = vsub.s32 1, %v95
    %v97 = vrot.slane %v88, %v96
    %v116 = vunpack.c.l.b16 %v72
    %v117 = vunpack.c.h.b16 %v72
    %v118 = vunpack.c.l.b16 %v73
    %v119 = vunpack.c.h.b16 %v73
    %v120 = vunpack.c.l.b16 %v74
    %v121 = vunpack.c.h.b16 %v74
    %v122 = vunpack.c.l.b16 %v75
    %v123 = vunpack.c.h.b16 %v75
    %v124 = vunpack.c.l.b16 %v76
    %v125 = vunpack.c.h.b16 %v76
    %v126 = vunpack.c.l.b16 %v77
    %v127 = vunpack.c.h.b16 %v77
    %v128 = vunpack.c.l.b16 %v78
    %v129 = vunpack.c.h.b16 %v78
    %v130 = vunpack.c.l.b16 %v79
    %v131 = vunpack.c.h.b16 %v79
    %v132 = vunpack.c.l.b16 %v80
    %v133 = vunpack.c.h.b16 %v80
    %v134 = vunpack.c.l.b16 %v81
    %v135 = vunpack.c.h.b16 %v81
    %v136 = vunpack.c.l.b16 %v82
    %v137 = vunpack.c.h.b16 %v82
    %v138 = vunpack.c.l.b16 %v83
    %v139 = vunpack.c.h.b16 %v83
    %v140 = vunpack.c.l.b16 %v84
    %v141 = vunpack.c.h.b16 %v84
    %v142 = vunpack.c.l.b16 %v85
    %v143 = vunpack.c.h.b16 %v85
    %v144 = vunpack.c.l.b16 %v86
    %v145 = vunpack.c.h.b16 %v86
    %v146 = vunpack.c.l.b16 %v87
    %v147 = vunpack.c.h.b16 %v87
    %v148 = vpack.c.b16 %v118, %v116
    %v149 = vpack.c.b16 %v119, %v117
    %v150 = vpack.c.b16 %v122, %v120
    %v151 = vpack.c.b16 %v123, %v121
    %v152 = vpack.c.b16 %v126, %v124
    %v153 = vpack.c.b16 %v127, %v125
    %v154 = vpack.c.b16 %v130, %v128
    %v155 = vpack.c.b16 %v131, %v129
    %v156 = vpack.c.b16 %v134, %v132
    %v157 = vpack.c.b16 %v135, %v133
    %v158 = vpack.c.b16 %v138, %v136
    %v159 = vpack.c.b16 %v139, %v137
    %v160 = vpack.c.b16 %v142, %v140
    %v161 = vpack.c.b16 %v143, %v141
    %v162 = vpack.c.b16 %v146, %v144
    %v163 = vpack.c.b16 %v147, %v145
    %180 = vmatprep.subr.bf16.mxu0 %v149
    %181 = vmatpush1.bf16.msra.mxu0 %v148
    %182 = vmatprep.subr.bf16.mxu0 %v151
    %183 = vmatpush1.bf16.msra.mxu0 %v150
    %184 = vmatprep.subr.bf16.mxu0 %v153
    %185 = vmatpush1.bf16.msra.mxu0 %v152
    %186 = vmatprep.subr.bf16.mxu0 %v155
    %187 = vmatpush1.bf16.msra.mxu0 %v154
    %188 = vmatprep.subr.bf16.mxu0 %v157
    %189 = vmatpush1.bf16.msra.mxu0 %v156
    %190 = vmatprep.subr.bf16.mxu0 %v159
    %191 = vmatpush1.bf16.msra.mxu0 %v158
    %192 = vmatprep.subr.bf16.mxu0 %v161
    %193 = vmatpush1.bf16.msra.mxu0 %v160
    %194 = vmatprep.subr.bf16.mxu0 %v163
    %195 = vmatpush1.bf16.msra.mxu0 %v162
    %196 = vmatprep.subr.bf16.mxu0 0
    %197 = vmatpush1.bf16.msra.mxu0 0
    %198 = vmatprep.subr.bf16.mxu0 0
    %199 = vmatpush1.bf16.msra.mxu0 0
    %200 = vmatprep.subr.bf16.mxu0 0
    %201 = vmatpush1.bf16.msra.mxu0 0
    %202 = vmatprep.subr.bf16.mxu0 0
    %203 = vmatpush1.bf16.msra.mxu0 0
    %204 = vmatprep.subr.bf16.mxu0 0
    %205 = vmatpush1.bf16.msra.mxu0 0
    %206 = vmatprep.subr.bf16.mxu0 0
    %207 = vmatpush1.bf16.msra.mxu0 0
    %208 = vmatprep.subr.bf16.mxu0 0
    %209 = vmatpush1.bf16.msra.mxu0 0
    %210 = vmatprep.subr.bf16.mxu0 0
    %211 = vmatpush1.bf16.msra.mxu0 0
    %212 = vmatprep.mubr.bf16.mxu0 0
    %213 = vmatmul.mubr.bf16.gmra.mrb[0].mxu0 %v71
    %v214 = vpop.f32.mrb[0].mxu0
    %v215 = vadd.f32 %v93, %v214
    %v216 = vpop.f32.mrb[0].mxu0
    %v217 = vadd.f32 %v97, %v216
    %v218 = vpop.f32.mrb[0].mxu0
    %v219 = vadd.f32 %v93, %v218
    %v220 = vpop.f32.mrb[0].mxu0
    %v221 = vadd.f32 %v97, %v220
    %222 = vdwg.mxu0
    %v223 = vmul.f32 %v215, %v215
    %v224 = vmul.f32 %v217, %v217
    %v225 = vmul.f32 %v219, %v219
    %v226 = vmul.f32 %v221, %v221
    %v227 = vmul.f32 %v223, %v215
    %v228 = vmul.f32 %v224, %v217
    %v229 = vmul.f32 %v225, %v219
    %v230 = vmul.f32 %v226, %v221
    %v231 = vmul.f32 %v227, 0.044715
    %v232 = vmul.f32 %v228, 0.044715
    %v233 = vmul.f32 %v229, 0.044715
    %v234 = vmul.f32 %v230, 0.044715
    %v235 = vadd.f32 %v215, %v231
    %v236 = vadd.f32 %v217, %v232
    %v237 = vadd.f32 %v219, %v233
    %v238 = vadd.f32 %v221, %v234
    %v239 = vmul.f32 %v235, 0.7978846
    %v240 = vmul.f32 %v236, 0.7978846
    %v241 = vmul.f32 %v237, 0.7978846
    %v242 = vmul.f32 %v238, 0.7978846
    %v243 = vmul.f32 %v215, 0.5
    %v244 = vmul.f32 %v217, 0.5
    %v245 = vmul.f32 %v219, 0.5
    %v246 = vmul.f32 %v221, 0.5
    %v247 = vtanh.pop %v239
    %v248 = vtanh.pop %v240
    %v249 = vtanh.pop %v241
    %v250 = vtanh.pop %v242
    %v251 = vadd.f32 %v247, 1.0
    %v252 = vadd.f32 %v248, 1.0
    %v253 = vadd.f32 %v249, 1.0
    %v254 = vadd.f32 %v250, 1.0
    %v255 = vmul.f32 %v243, %v251
    %v256 = vmul.f32 %v244, %v252
    %v257 = vmul.f32 %v245, %v253
    %v258 = vmul.f32 %v246, %v254
    %v259 = vld [vmem:[#allocation2] sm:$0xff]
    %v260 = vld [vmem:[#allocation2 + $0x8] sm:$0xff]
    %v261 = vpack.c.bf16 %v257, %v255
    %v262 = vpack.c.bf16 %v258, %v256
    %v263 = vld [vmem:[#allocation8] sm:$0xf]
    %v264 = vld [vmem:[#allocation8 + $0x4] sm:$0xf]
    %v265 = vld [vmem:[#allocation8 + $0x8] sm:$0xf]
    %v266 = vld [vmem:[#allocation8 + $0xc] sm:$0xf]
    %v267 = vld [vmem:[#allocation8 + $0x10] sm:$0xf]
    %v268 = vld [vmem:[#allocation8 + $0x14] sm:$0xf]
    %v269 = vld [vmem:[#allocation8 + $0x18] sm:$0xf]
    %v270 = vld [vmem:[#allocation8 + $0x1c] sm:$0xf]
    %v271 = vld [vmem:[#allocation8 + $0x20] sm:$0xf]
    %v272 = vld [vmem:[#allocation8 + $0x24] sm:$0xf]
    %v273 = vld [vmem:[#allocation8 + $0x28] sm:$0xf]
    %v274 = vld [vmem:[#allocation8 + $0x2c] sm:$0xf]
    %v275 = vld [vmem:[#allocation8 + $0x30] sm:$0xf]
    %v276 = vld [vmem:[#allocation8 + $0x34] sm:$0xf]
    %v277 = vld [vmem:[#allocation8 + $0x38] sm:$0xf]
    %v278 = vld [vmem:[#allocation8 + $0x3c] sm:$0xf]
    %v279 = vld [vmem:[#allocation8 + $0x40] sm:$0xf]
    %v280 = vld [vmem:[#allocation8 + $0x44] sm:$0xf]
    %v281 = vld [vmem:[#allocation8 + $0x48] sm:$0xf]
    %v282 = vld [vmem:[#allocation8 + $0x4c] sm:$0xf]
    %v283 = vld [vmem:[#allocation8 + $0x50] sm:$0xf]
    %v284 = vld [vmem:[#allocation8 + $0x54] sm:$0xf]
    %v285 = vld [vmem:[#allocation8 + $0x58] sm:$0xf]
    %v286 = vld [vmem:[#allocation8 + $0x5c] sm:$0xf]
    %v287 = vld [vmem:[#allocation8 + $0x60] sm:$0xf]
    %v288 = vld [vmem:[#allocation8 + $0x64] sm:$0xf]
    %v289 = vld [vmem:[#allocation8 + $0x68] sm:$0xf]
    %v290 = vld [vmem:[#allocation8 + $0x6c] sm:$0xf]
    %v291 = vld [vmem:[#allocation8 + $0x70] sm:$0xf]
    %v292 = vld [vmem:[#allocation8 + $0x74] sm:$0xf]
    %v293 = vld [vmem:[#allocation8 + $0x78] sm:$0xf]
    %v294 = vld [vmem:[#allocation8 + $0x7c] sm:$0xf]
    %v327 = vunpack.c.l.b16 %v263
    %v328 = vunpack.c.l.b16 %v264
    %v329 = vunpack.c.l.b16 %v265
    %v330 = vunpack.c.l.b16 %v266
    %v331 = vunpack.c.l.b16 %v267
    %v332 = vunpack.c.l.b16 %v268
    %v333 = vunpack.c.l.b16 %v269
    %v334 = vunpack.c.l.b16 %v270
    %v335 = vunpack.c.l.b16 %v271
    %v336 = vunpack.c.l.b16 %v272
    %v337 = vunpack.c.l.b16 %v273
    %v338 = vunpack.c.l.b16 %v274
    %v339 = vunpack.c.l.b16 %v275
    %v340 = vunpack.c.l.b16 %v276
    %v341 = vunpack.c.l.b16 %v277
    %v342 = vunpack.c.l.b16 %v278
    %v343 = vunpack.c.l.b16 %v279
    %v344 = vunpack.c.l.b16 %v280
    %v345 = vunpack.c.l.b16 %v281
    %v346 = vunpack.c.l.b16 %v282
    %v347 = vunpack.c.l.b16 %v283
    %v348 = vunpack.c.l.b16 %v284
    %v349 = vunpack.c.l.b16 %v285
    %v350 = vunpack.c.l.b16 %v286
    %v351 = vunpack.c.l.b16 %v287
    %v352 = vunpack.c.l.b16 %v288
    %v353 = vunpack.c.l.b16 %v289
    %v354 = vunpack.c.l.b16 %v290
    %v355 = vunpack.c.l.b16 %v291
    %v356 = vunpack.c.l.b16 %v292
    %v357 = vunpack.c.l.b16 %v293
    %v358 = vunpack.c.l.b16 %v294
    %v359 = vpack.c.b16 %v328, %v327
    %v360 = vpack.c.b16 %v330, %v329
    %v361 = vpack.c.b16 %v332, %v331
    %v362 = vpack.c.b16 %v334, %v333
    %v363 = vpack.c.b16 %v336, %v335
    %v364 = vpack.c.b16 %v338, %v337
    %v365 = vpack.c.b16 %v340, %v339
    %v366 = vpack.c.b16 %v342, %v341
    %v367 = vpack.c.b16 %v344, %v343
    %v368 = vpack.c.b16 %v346, %v345
    %v369 = vpack.c.b16 %v348, %v347
    %v370 = vpack.c.b16 %v350, %v349
    %v371 = vpack.c.b16 %v352, %v351
    %v372 = vpack.c.b16 %v354, %v353
    %v373 = vpack.c.b16 %v356, %v355
    %v374 = vpack.c.b16 %v358, %v357
    %391 = vmatprep.subr.bf16.mxu0 0
    %392 = vmatpush1.bf16.msra.mxu0 %v359
    %393 = vmatprep.subr.bf16.mxu0 0
    %394 = vmatpush1.bf16.msra.mxu0 %v360
    %395 = vmatprep.subr.bf16.mxu0 0
    %396 = vmatpush1.bf16.msra.mxu0 %v361
    %397 = vmatprep.subr.bf16.mxu0 0
    %398 = vmatpush1.bf16.msra.mxu0 %v362
    %399 = vmatprep.subr.bf16.mxu0 0
    %400 = vmatpush1.bf16.msra.mxu0 %v363
    %401 = vmatprep.subr.bf16.mxu0 0
    %402 = vmatpush1.bf16.msra.mxu0 %v364
    %403 = vmatprep.subr.bf16.mxu0 0
    %404 = vmatpush1.bf16.msra.mxu0 %v365
    %405 = vmatprep.subr.bf16.mxu0 0
    %406 = vmatpush1.bf16.msra.mxu0 %v366
    %407 = vmatprep.subr.bf16.mxu0 0
    %408 = vmatpush1.bf16.msra.mxu0 %v367
    %409 = vmatprep.subr.bf16.mxu0 0
    %410 = vmatpush1.bf16.msra.mxu0 %v368
    %411 = vmatprep.subr.bf16.mxu0 0
    %412 = vmatpush1.bf16.msra.mxu0 %v369
    %413 = vmatprep.subr.bf16.mxu0 0
    %414 = vmatpush1.bf16.msra.mxu0 %v370
    %415 = vmatprep.subr.bf16.mxu0 0
    %416 = vmatpush1.bf16.msra.mxu0 %v371
    %417 = vmatprep.subr.bf16.mxu0 0
    %418 = vmatpush1.bf16.msra.mxu0 %v372
    %419 = vmatprep.subr.bf16.mxu0 0
    %420 = vmatpush1.bf16.msra.mxu0 %v373
    %421 = vmatprep.subr.bf16.mxu0 0
    %422 = vmatpush1.bf16.msra.mxu0 %v374
    %423 = vmatprep.mubr.bf16.mxu0 %v262
    %424 = vmatmul.mubr.bf16.gmra.mrb[0].mxu0 %v261
    %v425 = vpop.f32.mrb[0].mxu0
    %v426 = vadd.f32 0.0, %v425
    %v427 = vpop.f32.mrb[0].mxu0
    %v428 = vpop.f32.mrb[0].mxu0
    %v429 = vadd.f32 0.0, %v428
    %v430 = vpop.f32.mrb[0].mxu0
    %431 = vdwg.mxu0
    %v432 = vadd.f32 %v259, %v426
    %v433 = vadd.f32 %v260, %v429
    %434 = vst [vmem:[#allocation2] sm:$0xff] %v432
    %435 = vst [vmem:[#allocation2 + $0x8] sm:$0xff] %v433
    // Predicated region
    $region38: #{tpu_custom_call.1} parent=1 // pred_check
      %p436 = pneg %p63
    $region39: #{tpu_custom_call.1} parent=1 // pred_check_branch
      %438 = sbr.rel (%p436) target = $region41
    $region40: #{tpu_custom_call.1} parent=1 // pred_region
      %v439 = vld [vmem:[#allocation2] sm:$0xff]
      %v440 = vld [vmem:[#allocation2 + $0x8] sm:$0xff]
      %v441 = vld [vmem:[%s4] sm:$0x1]
      %v443 = vlaneseq
      %v444 = vshrl.u32 %v443, 7
      %v445 = vsub.s32 0, %v444
      %v446 = vrot.slane %v441, %v445
      %v448 = vadd.f32 %v439, %v446
      %v449 = vadd.f32 %v440, %v446
      %450 = vst [vmem:[#allocation9] sm:$0xff] %v448
      %451 = vst [vmem:[#allocation9 + $0x8] sm:$0xff] %v449
    $region41: #{tpu_custom_call.1} parent=1 // pred_fallthru
      _
    // Predicated region
    $region42: #{tpu_custom_call.1} parent=1 // pred_check
      _
    $region43: #{tpu_custom_call.1} parent=1 // pred_check_branch
      %453 = sbr.rel (0) target = $region45
    $region44: #{tpu_custom_call.1} parent=1 // pred_region
      %s455 = ssub.s32 256, 256
      %456 = vsyncadd [#allocation5], %s455
      %s457 = sshll.u32 [#allocation9], 4
      %s458 = int_to_ptr.vmem [resolvable:$true] %s457
      %463 = dma.vmem_to_hbm [thread:$0]  %s458, 256, %s5, [#allocation5], 128, 128, 8
    $region45: #{tpu_custom_call.1} parent=1 // pred_fallthru
      _
    // Predicated region
    $region46: #{tpu_custom_call.1} parent=1 // pred_check
      _
    $region47: #{tpu_custom_call.1} parent=1 // pred_check_branch
      %465 = sbr.rel (0) target = $region49
    $region48: #{tpu_custom_call.1} parent=1 // pred_region
      %466 = dma.done [#allocation5], 256
    $region49: #{tpu_custom_call.1} parent=1 // pred_fallthru
      _
    %467 = vsyncpa [#allocation4], 1
    %468 = vsyncpa [#allocation7], 1
    %469 = vsyncpa [#allocation5], 1

</llo_original>
